<compile_context>
chip_gen: v7x
topology: tpu7x:2x2x1
jax: 0.10.0
libtpu: 0.0.40
codegen_flags: <defaults>
</compile_context>

<pallas_src>
import functools

import jax
import jax.numpy as jnp
from jax.experimental import pallas as pl
from jax.experimental.pallas import tpu as pltpu


def _round_up(a, m):
    return -(-a // m) * m


def _morph_kernel(x_ref, o_ref, *, H, W):
    # Block layout: (BT, HWp). Each sublane row holds one flattened HxW image
    # (lane-padded up to a multiple of 128 so stores are unmasked/lane-dense).
    compute_dtype = jnp.bfloat16 if x_ref.dtype == jnp.bfloat16 else jnp.float32
    x = x_ref[...].astype(compute_dtype)
    HWp = x.shape[-1]
    HW = H * W

    # Per-lane boundary masks. Pad lanes (>= HW) may fall inside a mask; their
    # outputs are sliced away by the wrapper, so it does not matter.
    lane = jax.lax.broadcasted_iota(jnp.int32, x.shape, 1)
    colm = lane % W
    first_row = lane < W
    last_row = lane >= (HW - W)
    first_col = colm == 0
    last_col = colm == (W - 1)

    # Neighbor shifts: one XLU lane roll + one boundary select (edge
    # replicate). Edge replicate equals cv2's clamped bilinear sampling and,
    # under min, is equivalent to cv2's +inf erosion border. Rolls are
    # circular; every wrapped lane is covered by a boundary mask.
    def up_row(a):      # a[i-1, j]
        return jnp.where(first_row, a, pltpu.roll(a, W, 1))

    def dn_row(a):      # a[i+1, j]
        return jnp.where(last_row, a, pltpu.roll(a, HWp - W, 1))

    def left_col(a):    # a[i, j-1]
        return jnp.where(first_col, a, pltpu.roll(a, 1, 1))

    def right_col(a):   # a[i, j+1]
        return jnp.where(last_col, a, pltpu.roll(a, HWp - 1, 1))

    # ---- 2x bilinear upsample (cv2 INTER_LINEAR), polyphase form -----------
    # dst row 2i   -> src y = i - 0.25 : 0.25*img[i-1] + 0.75*img[i] (clamp)
    # dst row 2i+1 -> src y = i + 0.25 : 0.75*img[i]   + 0.25*img[i+1] (clamp)
    # The final 2x2-mean downsample's 1/4 is folded into the column weights
    # (1/16, 3/16); shared 3/4 products are hoisted.
    x75 = 0.75 * x
    r_even = 0.25 * up_row(x) + x75            # virtual row 2i
    r_odd = x75 + 0.25 * dn_row(x)             # virtual row 2i+1

    def col_phases(a):                          # virtual cols 2j, 2j+1 (x 1/4)
        a3 = 0.1875 * a
        return 0.0625 * left_col(a) + a3, a3 + 0.0625 * right_col(a)

    p00, p01 = col_phases(r_even)   # up[2i,   2j], up[2i,   2j+1]   (x 1/4)
    p10, p11 = col_phases(r_odd)    # up[2i+1, 2j], up[2i+1, 2j+1]   (x 1/4)

    # ---- 3x3 erosion (min filter) on the virtual 2Hx2W image ---------------
    # CSE'd min tree; min commutes with the positive 1/4 pre-scale.
    v0 = jnp.minimum(p00, p10)
    v1 = jnp.minimum(p01, p11)
    m00 = jnp.minimum(up_row(p10), v0)          # rows 2i-1..2i+1, col 2j
    m01 = jnp.minimum(up_row(p11), v1)          # rows 2i-1..2i+1, col 2j+1
    m10 = jnp.minimum(v0, dn_row(p00))          # rows 2i..2i+2,   col 2j
    m11 = jnp.minimum(v1, dn_row(p01))          # rows 2i..2i+2,   col 2j+1

    h0 = jnp.minimum(m00, m01)
    h1 = jnp.minimum(m10, m11)
    e00 = jnp.minimum(left_col(m01), h0)        # cols 2j-1..2j+1
    e01 = jnp.minimum(h0, right_col(m00))       # cols 2j..2j+2
    e10 = jnp.minimum(left_col(m11), h1)
    e11 = jnp.minimum(h1, right_col(m10))

    # ---- 2x bilinear downsample == 2x2 mean (1/4 already folded in) --------
    # The (x+1)/2 ... *2-1 normalization cancels exactly, so store directly.
    o_ref[...] = ((e00 + e01) + (e10 + e11)).astype(o_ref.dtype)


def _pick_block_rows(batch, row_bytes, target_block_bytes, min_steps=8):
    """Images (sublane rows) per grid step: a multiple of 8 that (a) targets
    ~target_block_bytes per block, (b) keeps several grid steps alive for DMA
    pipelining / megacore sharding, and (c) prefers an even step count
    (v7x has two TensorCores)."""
    by_bytes = max(8, (target_block_bytes // max(1, row_bytes)) // 8 * 8)
    if batch >= 8 * min_steps:
        by_steps = max(8, (batch // min_steps) // 8 * 8)
    elif batch > 8:
        by_steps = max(8, _round_up(batch, 16) // 2)
    else:
        by_steps = 8
    bt = max(8, min(by_bytes, by_steps))
    steps = -(-batch // bt)
    if steps > 1 and steps % 2 == 1 and bt > 8:
        bt_alt = max(8, _round_up(-(-batch // (steps + 1)), 8))
        if (-(-batch // bt_alt)) % 2 == 0:
            bt = bt_alt
    return bt


def random_morphological(x, *, target_block_bytes=2 * 1024 * 1024):
    """x: (B, 1, H, W) float array in ~[-1, 1]; returns (B, 1, H, W) in x.dtype."""
    B, C, H, W = x.shape
    assert C == 1, "RandomMorphological squeezes a single-channel image"
    dtype = x.dtype
    HW = H * W
    HWp = _round_up(HW, 128)                 # lane-dense (unmasked) stores
    row_bytes = HWp * 4                      # f32 compute intermediates
    BT = _pick_block_rows(B, row_bytes, target_block_bytes)
    Bp = _round_up(B, BT)

    # Flatten each image to one lane row: a pure reshape, no HBM repack pass.
    xf = x.reshape(B, HW)
    if (Bp, HWp) != (B, HW):
        # Single fused zero-pad for both the batch (sublane) and lane axes.
        xf = jnp.pad(xf, ((0, Bp - B), (0, HWp - HW)))

    block_bytes = BT * HWp * 4
    # ~2 in + 2 out double buffers + ~10 live full-block f32 temporaries.
    vmem_limit = int(min(64 * 1024 * 1024,
                         max(16 * 1024 * 1024, 20 * block_bytes)))

    out = pl.pallas_call(
        functools.partial(_morph_kernel, H=H, W=W),
        out_shape=jax.ShapeDtypeStruct((Bp, HWp), dtype),
        grid=(Bp // BT,),
        in_specs=[pl.BlockSpec((BT, HWp), lambda i: (i, 0))],
        out_specs=pl.BlockSpec((BT, HWp), lambda i: (i, 0)),
        compiler_params=pltpu.CompilerParams(
            dimension_semantics=("parallel",),
            vmem_limit_bytes=vmem_limit,
        ),
    )(xf)

    return out[:B, :HW].reshape(B, 1, H, W)


# ---------------------------------------------------------------------------
# Pure-JAX reference (original normalized formulation, +inf erosion border)
# used only for the self-test below.
# ---------------------------------------------------------------------------
def _reference(x):
    B, C, H, W = x.shape
    img = (x[:, 0].astype(jnp.float32) + 1.0) * 0.5
    inf = jnp.float32(jnp.inf)
    prev_r = jnp.concatenate([img[:, :1], img[:, :-1]], axis=1)
    next_r = jnp.concatenate([img[:, 1:], img[:, -1:]], axis=1)
    r_even = 0.25 * prev_r + 0.75 * img
    r_odd = 0.75 * img + 0.25 * next_r

    def colp(a):
        l = jnp.concatenate([a[:, :, :1], a[:, :, :-1]], axis=2)
        r = jnp.concatenate([a[:, :, 1:], a[:, :, -1:]], axis=2)
        return 0.25 * l + 0.75 * a, 0.75 * a + 0.25 * r

    p00, p01 = colp(r_even)
    p10, p11 = colp(r_odd)

    def srm(a):
        return jnp.concatenate(
            [jnp.full((B, 1, W), inf, jnp.float32), a[:, :-1]], axis=1)

    def srp(a):
        return jnp.concatenate(
            [a[:, 1:], jnp.full((B, 1, W), inf, jnp.float32)], axis=1)

    def scm(a):
        return jnp.concatenate(
            [jnp.full((B, H, 1), inf, jnp.float32), a[:, :, :-1]], axis=2)

    def scp(a):
        return jnp.concatenate(
            [a[:, :, 1:], jnp.full((B, H, 1), inf, jnp.float32)], axis=2)

    m00 = jnp.minimum(jnp.minimum(srm(p10), p00), p10)
    m01 = jnp.minimum(jnp.minimum(srm(p11), p01), p11)
    m10 = jnp.minimum(jnp.minimum(p00, p10), srp(p00))
    m11 = jnp.minimum(jnp.minimum(p01, p11), srp(p01))
    e00 = jnp.minimum(jnp.minimum(scm(m01), m00), m01)
    e01 = jnp.minimum(jnp.minimum(m00, m01), scp(m00))
    e10 = jnp.minimum(jnp.minimum(scm(m11), m10), m11)
    e11 = jnp.minimum(jnp.minimum(m10, m11), scp(m10))
    down = 0.25 * (e00 + e01 + e10 + e11)
    return (down * 2.0 - 1.0)[:, None]


if __name__ == "__main__":
    key = jax.random.PRNGKey(0)

    # Primary test: batch=2, single channel, 16x16 (as the module implies).
    x = jax.random.uniform(key, (2, 1, 16, 16), jnp.float32,
                           minval=-1.0, maxval=1.0)
    y = random_morphological(x)
    jax.block_until_ready(y)
    assert y.shape == (2, 1, 16, 16) and y.dtype == jnp.float32
    assert bool(jnp.all(jnp.isfinite(y)))
    y_ref = _reference(x)
    assert bool(jnp.allclose(y, y_ref, atol=1e-4)), "mismatch vs reference"

    # Second test: batch not a multiple of the block-row count, H=8.
    k2 = jax.random.split(key)[0]
    x2 = jax.random.uniform(k2, (9, 1, 8, 16), jnp.float32,
                            minval=-1.0, maxval=1.0)
    y2 = random_morphological(x2)
    jax.block_until_ready(y2)
    assert y2.shape == (9, 1, 8, 16)
    assert bool(jnp.allclose(y2, _reference(x2), atol=1e-4)), \
        "mismatch vs reference (multi-step grid case)"

    print("KERNEL_OK")
</pallas_src>

<mosaic_0001>
module attributes {stable_mosaic.version = 11 : i64} {
  func.func @_morph_kernel(%arg0: i32, %arg1: memref<8x256xf32, #tpu.memory_space<vmem>>, %arg2: memref<8x256xf32, #tpu.memory_space<vmem>>) attributes {dimension_semantics = [#tpu.dimension_semantics<parallel>], iteration_bounds = array<i64: 1>, scalar_prefetch = 0 : i64, scratch_operands = 0 : i64, tpu.core_type = #tpu.core_type<tc>, window_params = [{transform_indices = @transform_0, window_bounds = array<i64: 8, 256>}, {transform_indices = @transform_1, window_bounds = array<i64: 8, 256>}]} {
    %c0 = arith.constant 0 : index
    %c0_0 = arith.constant 0 : index
    %0 = vector.load %arg1[%c0, %c0_0] : memref<8x256xf32, #tpu.memory_space<vmem>>, vector<8x256xf32>
    %1 = tpu.iota {dimensions = array<i32: 1>} : vector<8x256xi32>
    %c16_i32 = arith.constant 16 : i32
    %c0_i32 = arith.constant 0 : i32
    %2 = arith.cmpi eq, %c16_i32, %c0_i32 : i32
    %c1_i32 = arith.constant 1 : i32
    %3 = arith.select %2, %c1_i32, %c16_i32 : i32
    %4 = vector.broadcast %3 : i32 to vector<8x256xi32>
    %5 = arith.remsi %1, %4 : vector<8x256xi32>
    %c0_i32_1 = arith.constant 0 : i32
    %6 = vector.broadcast %c0_i32_1 : i32 to vector<8x256xi32>
    %7 = arith.cmpi ne, %5, %6 : vector<8x256xi32>
    %c0_i32_2 = arith.constant 0 : i32
    %8 = vector.broadcast %c0_i32_2 : i32 to vector<8x256xi32>
    %9 = arith.cmpi slt, %5, %8 : vector<8x256xi32>
    %c0_i32_3 = arith.constant 0 : i32
    %10 = arith.cmpi slt, %3, %c0_i32_3 : i32
    %11 = vector.broadcast %10 : i1 to vector<8x256xi1>
    %12 = vector.broadcast %11 : vector<8x256xi1> to vector<8x256xi1>
    %13 = arith.xori %9, %12 : vector<8x256xi1>
    %14 = arith.andi %13, %7 : vector<8x256xi1>
    %15 = vector.broadcast %3 : i32 to vector<8x256xi32>
    %16 = arith.addi %5, %15 : vector<8x256xi32>
    %17 = arith.select %14, %16, %5 : vector<8x256xi1>, vector<8x256xi32>
    %c16_i32_4 = arith.constant 16 : i32
    %18 = vector.broadcast %c16_i32_4 : i32 to vector<8x256xi32>
    %19 = arith.cmpi slt, %1, %18 : vector<8x256xi32>
    %c240_i32 = arith.constant 240 : i32
    %20 = vector.broadcast %c240_i32 : i32 to vector<8x256xi32>
    %21 = arith.cmpi sge, %1, %20 : vector<8x256xi32>
    %c0_i32_5 = arith.constant 0 : i32
    %22 = vector.broadcast %c0_i32_5 : i32 to vector<8x256xi32>
    %23 = arith.cmpi eq, %17, %22 : vector<8x256xi32>
    %c15_i32 = arith.constant 15 : i32
    %24 = vector.broadcast %c15_i32 : i32 to vector<8x256xi32>
    %25 = arith.cmpi eq, %17, %24 : vector<8x256xi32>
    %cst = arith.constant 7.500000e-01 : f32
    %26 = vector.broadcast %cst : f32 to vector<8x256xf32>
    %27 = arith.mulf %26, %0 : vector<8x256xf32>
    %c16_i32_6 = arith.constant 16 : i32
    %28 = tpu.dynamic_rotate %0 by %c16_i32_6 dim 1 : vector<8x256xf32>, i32 -> vector<8x256xf32>
    %29 = arith.select %19, %0, %28 : vector<8x256xi1>, vector<8x256xf32>
    %cst_7 = arith.constant 2.500000e-01 : f32
    %30 = vector.broadcast %cst_7 : f32 to vector<8x256xf32>
    %31 = arith.mulf %30, %29 : vector<8x256xf32>
    %32 = arith.addf %31, %27 : vector<8x256xf32>
    %c240_i32_8 = arith.constant 240 : i32
    %33 = tpu.dynamic_rotate %0 by %c240_i32_8 dim 1 : vector<8x256xf32>, i32 -> vector<8x256xf32>
    %34 = arith.select %21, %0, %33 : vector<8x256xi1>, vector<8x256xf32>
    %cst_9 = arith.constant 2.500000e-01 : f32
    %35 = vector.broadcast %cst_9 : f32 to vector<8x256xf32>
    %36 = arith.mulf %35, %34 : vector<8x256xf32>
    %37 = arith.addf %27, %36 : vector<8x256xf32>
    %cst_10 = arith.constant 1.875000e-01 : f32
    %38 = vector.broadcast %cst_10 : f32 to vector<8x256xf32>
    %39 = arith.mulf %38, %32 : vector<8x256xf32>
    %c1_i32_11 = arith.constant 1 : i32
    %40 = tpu.dynamic_rotate %32 by %c1_i32_11 dim 1 : vector<8x256xf32>, i32 -> vector<8x256xf32>
    %41 = arith.select %23, %32, %40 : vector<8x256xi1>, vector<8x256xf32>
    %cst_12 = arith.constant 6.250000e-02 : f32
    %42 = vector.broadcast %cst_12 : f32 to vector<8x256xf32>
    %43 = arith.mulf %42, %41 : vector<8x256xf32>
    %44 = arith.addf %43, %39 : vector<8x256xf32>
    %c255_i32 = arith.constant 255 : i32
    %45 = tpu.dynamic_rotate %32 by %c255_i32 dim 1 : vector<8x256xf32>, i32 -> vector<8x256xf32>
    %46 = arith.select %25, %32, %45 : vector<8x256xi1>, vector<8x256xf32>
    %cst_13 = arith.constant 6.250000e-02 : f32
    %47 = vector.broadcast %cst_13 : f32 to vector<8x256xf32>
    %48 = arith.mulf %47, %46 : vector<8x256xf32>
    %49 = arith.addf %39, %48 : vector<8x256xf32>
    %cst_14 = arith.constant 1.875000e-01 : f32
    %50 = vector.broadcast %cst_14 : f32 to vector<8x256xf32>
    %51 = arith.mulf %50, %37 : vector<8x256xf32>
    %c1_i32_15 = arith.constant 1 : i32
    %52 = tpu.dynamic_rotate %37 by %c1_i32_15 dim 1 : vector<8x256xf32>, i32 -> vector<8x256xf32>
    %53 = arith.select %23, %37, %52 : vector<8x256xi1>, vector<8x256xf32>
    %cst_16 = arith.constant 6.250000e-02 : f32
    %54 = vector.broadcast %cst_16 : f32 to vector<8x256xf32>
    %55 = arith.mulf %54, %53 : vector<8x256xf32>
    %56 = arith.addf %55, %51 : vector<8x256xf32>
    %c255_i32_17 = arith.constant 255 : i32
    %57 = tpu.dynamic_rotate %37 by %c255_i32_17 dim 1 : vector<8x256xf32>, i32 -> vector<8x256xf32>
    %58 = arith.select %25, %37, %57 : vector<8x256xi1>, vector<8x256xf32>
    %cst_18 = arith.constant 6.250000e-02 : f32
    %59 = vector.broadcast %cst_18 : f32 to vector<8x256xf32>
    %60 = arith.mulf %59, %58 : vector<8x256xf32>
    %61 = arith.addf %51, %60 : vector<8x256xf32>
    %62 = arith.minimumf %44, %56 : vector<8x256xf32>
    %63 = arith.minimumf %49, %61 : vector<8x256xf32>
    %c16_i32_19 = arith.constant 16 : i32
    %64 = tpu.dynamic_rotate %56 by %c16_i32_19 dim 1 : vector<8x256xf32>, i32 -> vector<8x256xf32>
    %65 = arith.select %19, %56, %64 : vector<8x256xi1>, vector<8x256xf32>
    %66 = arith.minimumf %65, %62 : vector<8x256xf32>
    %c16_i32_20 = arith.constant 16 : i32
    %67 = tpu.dynamic_rotate %61 by %c16_i32_20 dim 1 : vector<8x256xf32>, i32 -> vector<8x256xf32>
    %68 = arith.select %19, %61, %67 : vector<8x256xi1>, vector<8x256xf32>
    %69 = arith.minimumf %68, %63 : vector<8x256xf32>
    %c240_i32_21 = arith.constant 240 : i32
    %70 = tpu.dynamic_rotate %44 by %c240_i32_21 dim 1 : vector<8x256xf32>, i32 -> vector<8x256xf32>
    %71 = arith.select %21, %44, %70 : vector<8x256xi1>, vector<8x256xf32>
    %72 = arith.minimumf %62, %71 : vector<8x256xf32>
    %c240_i32_22 = arith.constant 240 : i32
    %73 = tpu.dynamic_rotate %49 by %c240_i32_22 dim 1 : vector<8x256xf32>, i32 -> vector<8x256xf32>
    %74 = arith.select %21, %49, %73 : vector<8x256xi1>, vector<8x256xf32>
    %75 = arith.minimumf %63, %74 : vector<8x256xf32>
    %76 = arith.minimumf %66, %69 : vector<8x256xf32>
    %77 = arith.minimumf %72, %75 : vector<8x256xf32>
    %c1_i32_23 = arith.constant 1 : i32
    %78 = tpu.dynamic_rotate %69 by %c1_i32_23 dim 1 : vector<8x256xf32>, i32 -> vector<8x256xf32>
    %79 = arith.select %23, %69, %78 : vector<8x256xi1>, vector<8x256xf32>
    %80 = arith.minimumf %79, %76 : vector<8x256xf32>
    %c255_i32_24 = arith.constant 255 : i32
    %81 = tpu.dynamic_rotate %66 by %c255_i32_24 dim 1 : vector<8x256xf32>, i32 -> vector<8x256xf32>
    %82 = arith.select %25, %66, %81 : vector<8x256xi1>, vector<8x256xf32>
    %83 = arith.minimumf %76, %82 : vector<8x256xf32>
    %c1_i32_25 = arith.constant 1 : i32
    %84 = tpu.dynamic_rotate %75 by %c1_i32_25 dim 1 : vector<8x256xf32>, i32 -> vector<8x256xf32>
    %85 = arith.select %23, %75, %84 : vector<8x256xi1>, vector<8x256xf32>
    %86 = arith.minimumf %85, %77 : vector<8x256xf32>
    %c255_i32_26 = arith.constant 255 : i32
    %87 = tpu.dynamic_rotate %72 by %c255_i32_26 dim 1 : vector<8x256xf32>, i32 -> vector<8x256xf32>
    %88 = arith.select %25, %72, %87 : vector<8x256xi1>, vector<8x256xf32>
    %89 = arith.minimumf %77, %88 : vector<8x256xf32>
    %90 = arith.addf %80, %83 : vector<8x256xf32>
    %91 = arith.addf %86, %89 : vector<8x256xf32>
    %92 = arith.addf %90, %91 : vector<8x256xf32>
    %c0_27 = arith.constant 0 : index
    %c0_28 = arith.constant 0 : index
    %93 = vector.load %arg2[%c0_27, %c0_28] : memref<8x256xf32, #tpu.memory_space<vmem>>, vector<8x256xf32>
    tpu.vector_store %arg2[%c0_27, %c0_28], %92 {strides = array<i32>} : memref<8x256xf32, #tpu.memory_space<vmem>>, vector<8x256xf32>,
    return
  }
  func.func @transform_0(%arg0: i32) -> (i32, i32) {
    %c0_i32 = arith.constant 0 : i32
    %c0_i32_0 = arith.constant 0 : i32
    return %arg0, %c0_i32 : i32, i32
  }
  func.func @transform_1(%arg0: i32) -> (i32, i32) {
    %c0_i32 = arith.constant 0 : i32
    %c0_i32_0 = arith.constant 0 : i32
    return %arg0, %c0_i32 : i32, i32
  }
}

</mosaic_0001>

<llo_original>
// kernel: tpu_custom_call.1
$region0: #{tpu_custom_call.1}
  #allocation0 [shape = 'u32[]', space=smem, size = 0x4, offset = 0x4, fixed_abs, tag = 'smem constant byte address 0x4 - core index']
  #allocation1 [shape = 'u32[144,128]{1,0:T(1,128)}', space=vmem, size = 0x12000, scoped, tag = 'internal scratch']
  %s0 = inlined_call_operand.hbm [shape: f32[8,256], index: 0, kind: input, shape index: {}]
  %s1 = inlined_call_operand.hbm [shape: f32[8,256], index: 1, kind: output, shape index: {}]
  %s2 = sld [smem:[#allocation0]]
  $region18: #{tpu_custom_call.1} parent=0
    _
  %s4 = ssub.s32 1, %s2
  %s5 = scalar_select 0, %s4, %s2
  $region1: #{tpu_custom_call.1} parent=0
    #allocation2 [shape = 'u8[8192]{0}', space=vmem, size = 0x2000, scoped, tag = 'input window, operand 0, single buffered']
    #allocation3 [shape = 's32[1]{0}', space=sflag, size = 0x4, scoped, tag = 'scoped memory for tpu_custom_call.1']
    #allocation4 [shape = 's32[1]{0}', space=sflag, size = 0x4, scoped, tag = 'scoped memory for tpu_custom_call.1']
    #allocation5 [shape = 'u8[8192]{0}', space=vmem, size = 0x2000, scoped, tag = 'output window, operand 0, single buffered']
    %6 = vsyncpa [#allocation3], 0
    %7 = vsyncpa [#allocation4], 0
    // Predicated region
    $region2: #{tpu_custom_call.1} parent=1 // pred_check
      _
    $region3: #{tpu_custom_call.1} parent=1 // pred_check_branch
      %9 = sbr.rel (0) target = $region5
    $region4: #{tpu_custom_call.1} parent=1 // pred_region
      %s11 = ssub.s32 256, 256
      %12 = vsyncadd [#allocation3], %s11
      %s14 = sshll.u32 [#allocation2], 4
      %s15 = int_to_ptr.vmem [resolvable:$true] %s14
      %17 = dma.hbm_to_vmem [thread:$0]  %s0, 256, %s15, [#allocation3]
    $region5: #{tpu_custom_call.1} parent=1 // pred_fallthru
      _
    // Predicated region
    $region6: #{tpu_custom_call.1} parent=1 // pred_check
      _
    $region7: #{tpu_custom_call.1} parent=1 // pred_check_branch
      %19 = sbr.rel (0) target = $region9
    $region8: #{tpu_custom_call.1} parent=1 // pred_region
      %20 = dma.done [#allocation3], 256
    $region9: #{tpu_custom_call.1} parent=1 // pred_fallthru
      _
    %v21 = vld [vmem:[#allocation2] sm:$0xff]
    %v22 = vld [vmem:[#allocation2 + $0x8] sm:$0xff]
    %v23 = vlaneseq
    %v24 = vand.u32 %v23, 127
    %v25 = vadd.s32 %v24, 128
    %vm26 = vcmp.lt.s32.totalorder %v24, 0
    %v27 = vsub.s32 0, %v24
    %v28 = vsel %vm26, %v27, %v24
    %v29 = vshrl.u32 %v28, 4
    %v30 = vand.u32 %v28, 15
    %v31 = vsub.s32 0, %v30
    %v32 = vsel %vm26, %v31, %v30
    %vm33 = vcmp.lt.s32.totalorder %v25, 0
    %v34 = vsub.s32 0, %v25
    %v35 = vsel %vm33, %v34, %v25
    %v36 = vshrl.u32 %v35, 4
    %v37 = vand.u32 %v35, 15
    %v38 = vsub.s32 0, %v37
    %v39 = vsel %vm33, %v38, %v37
    %vm40 = vcmp.ne.s32.totalorder %v32, 0
    %vm41 = vcmp.ne.s32.totalorder %v39, 0
    %vm42 = vcmp.lt.s32.totalorder %v32, 0
    %vm43 = vcmp.lt.s32.totalorder %v39, 0
    %vm44 = vmand %vm42, %vm40
    %vm45 = vmand %vm43, %vm41
    %v46 = vadd.s32 %v32, 16
    %v47 = vadd.s32 %v39, 16
    %v48 = vsel %vm44, %v46, %v32
    %v49 = vsel %vm45, %v47, %v39
    %vm50 = vcmp.lt.s32.totalorder %v24, 16
    %vm51 = vcmp.lt.s32.totalorder %v25, 16
    %vm52 = vcmp.ge.s32.totalorder %v24, 240
    %vm53 = vcmp.ge.s32.totalorder %v25, 240
    %vm54 = vcmp.eq.s32.totalorder %v48, 0
    %vm55 = vcmp.eq.s32.totalorder %v49, 0
    %vm56 = vcmp.eq.s32.totalorder %v48, 15
    %vm57 = vcmp.eq.s32.totalorder %v49, 15
    %v58 = vmul.f32 %v21, 0.75
    %v59 = vmul.f32 %v22, 0.75
    %60 = vrot.lane.b32.xlu0 %v21, 16
    %v61 = vpop.permute.xlu0 %60
    %62 = vrot.lane.b32.xlu0 %v22, 16
    %v63 = vpop.permute.xlu0 %62
    %v64 = vsel %vm50, %v61, %v63
    %v65 = vsel %vm50, %v63, %v61
    %v66 = vsel %vm50, %v21, %v65
    %v67 = vsel %vm51, %v22, %v64
    %v68 = vmul.f32 %v66, 0.25
    %v69 = vmul.f32 %v67, 0.25
    %v70 = vadd.f32 %v68, %v58
    %v71 = vadd.f32 %v69, %v59
    %72 = vrot.lane.b32.xlu0 %v21, 112
    %v73 = vpop.permute.xlu0 %72
    %74 = vrot.lane.b32.xlu0 %v22, 112
    %v75 = vpop.permute.xlu0 %74
    %vm76 = vcmp.lt.s32.totalorder %v24, 112
    %v77 = vsel %vm76, %v73, %v75
    %v78 = vsel %vm76, %v75, %v73
    %v79 = vsel %vm52, %v21, %v77
    %v80 = vsel %vm53, %v22, %v78
    %v81 = vmul.f32 %v79, 0.25
    %v82 = vmul.f32 %v80, 0.25
    %v83 = vadd.f32 %v58, %v81
    %v84 = vadd.f32 %v59, %v82
    %v85 = vmul.f32 %v70, 0.1875
    %v86 = vmul.f32 %v71, 0.1875
    %87 = vrot.lane.b32.xlu0 %v70, 1
    %v88 = vpop.permute.xlu0 %87
    %89 = vrot.lane.b32.xlu0 %v71, 1
    %v90 = vpop.permute.xlu0 %89
    %vm91 = vcmp.lt.s32.totalorder %v24, 1
    %v92 = vsel %vm91, %v88, %v90
    %v93 = vsel %vm91, %v90, %v88
    %v94 = vsel %vm54, %v70, %v93
    %v95 = vsel %vm55, %v71, %v92
    %v96 = vmul.f32 %v94, 0.0625
    %v97 = vmul.f32 %v95, 0.0625
    %v98 = vadd.f32 %v96, %v85
    %v99 = vadd.f32 %v97, %v86
    %100 = vrot.lane.b32.xlu0 %v70, 127
    %v101 = vpop.permute.xlu0 %100
    %102 = vrot.lane.b32.xlu0 %v71, 127
    %v103 = vpop.permute.xlu0 %102
    %vm104 = vcmp.lt.s32.totalorder %v24, 127
    %v105 = vsel %vm104, %v101, %v103
    %v106 = vsel %vm104, %v103, %v101
    %v107 = vsel %vm56, %v70, %v105
    %v108 = vsel %vm57, %v71, %v106
    %v109 = vmul.f32 %v107, 0.0625
    %v110 = vmul.f32 %v108, 0.0625
    %v111 = vadd.f32 %v85, %v109
    %v112 = vadd.f32 %v86, %v110
    %v113 = vmul.f32 %v83, 0.1875
    %v114 = vmul.f32 %v84, 0.1875
    %115 = vrot.lane.b32.xlu0 %v83, 1
    %v116 = vpop.permute.xlu0 %115
    %117 = vrot.lane.b32.xlu0 %v84, 1
    %v118 = vpop.permute.xlu0 %117
    %v119 = vsel %vm91, %v116, %v118
    %v120 = vsel %vm91, %v118, %v116
    %v121 = vsel %vm54, %v83, %v120
    %v122 = vsel %vm55, %v84, %v119
    %v123 = vmul.f32 %v121, 0.0625
    %v124 = vmul.f32 %v122, 0.0625
    %v125 = vadd.f32 %v123, %v113
    %v126 = vadd.f32 %v124, %v114
    %127 = vrot.lane.b32.xlu0 %v83, 127
    %v128 = vpop.permute.xlu0 %127
    %129 = vrot.lane.b32.xlu0 %v84, 127
    %v130 = vpop.permute.xlu0 %129
    %v131 = vsel %vm104, %v128, %v130
    %v132 = vsel %vm104, %v130, %v128
    %v133 = vsel %vm56, %v83, %v131
    %v134 = vsel %vm57, %v84, %v132
    %v135 = vmul.f32 %v133, 0.0625
    %v136 = vmul.f32 %v134, 0.0625
    %v137 = vadd.f32 %v113, %v135
    %v138 = vadd.f32 %v114, %v136
    %v139 = vmin.f32 %v98, %v125
    %v140 = vmin.f32 %v99, %v126
    %v141 = vmin.f32 %v111, %v137
    %v142 = vmin.f32 %v112, %v138
    %143 = vrot.lane.b32.xlu0 %v125, 16
    %v144 = vpop.permute.xlu0 %143
    %145 = vrot.lane.b32.xlu0 %v126, 16
    %v146 = vpop.permute.xlu0 %145
    %v147 = vsel %vm50, %v144, %v146
    %v148 = vsel %vm50, %v146, %v144
    %v149 = vsel %vm50, %v125, %v148
    %v150 = vsel %vm51, %v126, %v147
    %v151 = vmin.f32 %v149, %v139
    %v152 = vmin.f32 %v150, %v140
    %153 = vrot.lane.b32.xlu0 %v137, 16
    %v154 = vpop.permute.xlu0 %153
    %155 = vrot.lane.b32.xlu0 %v138, 16
    %v156 = vpop.permute.xlu0 %155
    %v157 = vsel %vm50, %v154, %v156
    %v158 = vsel %vm50, %v156, %v154
    %v159 = vsel %vm50, %v137, %v158
    %v160 = vsel %vm51, %v138, %v157
    %v161 = vmin.f32 %v159, %v141
    %v162 = vmin.f32 %v160, %v142
    %163 = vrot.lane.b32.xlu0 %v98, 112
    %v164 = vpop.permute.xlu0 %163
    %165 = vrot.lane.b32.xlu0 %v99, 112
    %v166 = vpop.permute.xlu0 %165
    %v167 = vsel %vm76, %v164, %v166
    %v168 = vsel %vm76, %v166, %v164
    %v169 = vsel %vm52, %v98, %v167
    %v170 = vsel %vm53, %v99, %v168
    %v171 = vmin.f32 %v139, %v169
    %v172 = vmin.f32 %v140, %v170
    %173 = vrot.lane.b32.xlu0 %v111, 112
    %v174 = vpop.permute.xlu0 %173
    %175 = vrot.lane.b32.xlu0 %v112, 112
    %v176 = vpop.permute.xlu0 %175
    %v177 = vsel %vm76, %v174, %v176
    %v178 = vsel %vm76, %v176, %v174
    %v179 = vsel %vm52, %v111, %v177
    %v180 = vsel %vm53, %v112, %v178
    %v181 = vmin.f32 %v141, %v179
    %v182 = vmin.f32 %v142, %v180
    %v183 = vmin.f32 %v151, %v161
    %v184 = vmin.f32 %v152, %v162
    %v185 = vmin.f32 %v171, %v181
    %v186 = vmin.f32 %v172, %v182
    %187 = vrot.lane.b32.xlu0 %v161, 1
    %v188 = vpop.permute.xlu0 %187
    %189 = vrot.lane.b32.xlu0 %v162, 1
    %v190 = vpop.permute.xlu0 %189
    %v191 = vsel %vm91, %v188, %v190
    %v192 = vsel %vm91, %v190, %v188
    %v193 = vsel %vm54, %v161, %v192
    %v194 = vsel %vm55, %v162, %v191
    %v195 = vmin.f32 %v193, %v183
    %v196 = vmin.f32 %v194, %v184
    %197 = vrot.lane.b32.xlu0 %v151, 127
    %v198 = vpop.permute.xlu0 %197
    %199 = vrot.lane.b32.xlu0 %v152, 127
    %v200 = vpop.permute.xlu0 %199
    %v201 = vsel %vm104, %v198, %v200
    %v202 = vsel %vm104, %v200, %v198
    %v203 = vsel %vm56, %v151, %v201
    %v204 = vsel %vm57, %v152, %v202
    %v205 = vmin.f32 %v183, %v203
    %v206 = vmin.f32 %v184, %v204
    %207 = vrot.lane.b32.xlu0 %v181, 1
    %v208 = vpop.permute.xlu0 %207
    %209 = vrot.lane.b32.xlu0 %v182, 1
    %v210 = vpop.permute.xlu0 %209
    %v211 = vsel %vm91, %v208, %v210
    %v212 = vsel %vm91, %v210, %v208
    %v213 = vsel %vm54, %v181, %v212
    %v214 = vsel %vm55, %v182, %v211
    %v215 = vmin.f32 %v213, %v185
    %v216 = vmin.f32 %v214, %v186
    %217 = vrot.lane.b32.xlu0 %v171, 127
    %v218 = vpop.permute.xlu0 %217
    %219 = vrot.lane.b32.xlu0 %v172, 127
    %v220 = vpop.permute.xlu0 %219
    %v221 = vsel %vm104, %v218, %v220
    %v222 = vsel %vm104, %v220, %v218
    %v223 = vsel %vm56, %v171, %v221
    %v224 = vsel %vm57, %v172, %v222
    %v225 = vmin.f32 %v185, %v223
    %v226 = vmin.f32 %v186, %v224
    %v227 = vadd.f32 %v195, %v205
    %v228 = vadd.f32 %v196, %v206
    %v229 = vadd.f32 %v215, %v225
    %v230 = vadd.f32 %v216, %v226
    %v231 = vadd.f32 %v227, %v229
    %v232 = vadd.f32 %v228, %v230
    %233 = vst [vmem:[#allocation5] sm:$0xff] %v231
    %234 = vst [vmem:[#allocation5 + $0x8] sm:$0xff] %v232
    // Predicated region
    $region10: #{tpu_custom_call.1} parent=1 // pred_check
      _
    $region11: #{tpu_custom_call.1} parent=1 // pred_check_branch
      %236 = sbr.rel (0) target = $region13
    $region12: #{tpu_custom_call.1} parent=1 // pred_region
      %s238 = ssub.s32 256, 256
      %239 = vsyncadd [#allocation4], %s238
      %s241 = sshll.u32 [#allocation5], 4
      %s242 = int_to_ptr.vmem [resolvable:$true] %s241
      %244 = dma.vmem_to_hbm [thread:$0]  %s242, 256, %s1, [#allocation4]
    $region13: #{tpu_custom_call.1} parent=1 // pred_fallthru
      _
    // Predicated region
    $region14: #{tpu_custom_call.1} parent=1 // pred_check
      _
    $region15: #{tpu_custom_call.1} parent=1 // pred_check_branch
      %246 = sbr.rel (0) target = $region17
    $region16: #{tpu_custom_call.1} parent=1 // pred_region
      %247 = dma.done [#allocation4], 256
    $region17: #{tpu_custom_call.1} parent=1 // pred_fallthru
      _
    %248 = vsyncpa [#allocation3], 1
    %249 = vsyncpa [#allocation4], 1

</llo_original>
